<compile_context>
chip_gen: v7x
topology: tpu7x:2x2x1
jax: 0.10.0
libtpu: 0.0.40
codegen_flags: <defaults>
</compile_context>

<pallas_src>
import jax
import jax.numpy as jnp
from jax.experimental import pallas as pl
from jax.experimental.pallas import tpu as pltpu


def _round_up(x, m):
    return (x + m - 1) // m * m


def _vmem_limit_bytes():
    """Generation-aware scoped-VMEM budget (v7x: 64 MiB/core, v5e/v6e: 128 MiB)."""
    cap = 64 * 1024 * 1024  # conservative fallback = smallest (v7x) physical VMEM
    try:
        info = pltpu.get_tpu_info()
        cap = int(getattr(info, "vmem_capacity_bytes", cap)) or cap
    except Exception:
        pass
    return min(cap * 3 // 4, 100 * 1024 * 1024)


def _mlp_kernel(eg_ref, es_ref, ht_ref, w1g_ref, w1s_ref, w1t_ref,
                b1_ref, w2_ref, b2_ref, out_ref):
    # First linear on the MXU: three lane-dense K=128 pushes against the
    # VMEM-resident block-diagonal W1 blocks.  (Intentionally not fused into
    # one concat-matmul: an in-kernel concat would add VMEM copies and the
    # MXU has huge slack in this HBM-bound kernel.)
    h = (jnp.dot(eg_ref[...], w1g_ref[...], preferred_element_type=jnp.float32)
         + jnp.dot(es_ref[...], w1s_ref[...], preferred_element_type=jnp.float32)
         + jnp.dot(ht_ref[...], w1t_ref[...], preferred_element_type=jnp.float32))
    h = h + b1_ref[...]
    # LeakyReLU (PyTorch default slope 0.01), kept in f32 (v5e VPU has no bf16).
    h = jnp.where(h >= 0, h, 0.01 * h)
    # Second linear: block-diagonal (L, p) matmul -> p outputs per packed row.
    out = jnp.dot(h, w2_ref[...], preferred_element_type=jnp.float32) + b2_ref[...]
    out_ref[...] = out.astype(out_ref.dtype)


def mlp_forward(e_g, e_s, h_t, params, *, rows_per_step=None):
    """params: dict with w1 (3D, D), b1 (D,), w2 (D, 1), b2 (1,).

    Activations are streamed in the dtype they arrive in (f32 or bf16 — pass
    bf16 inputs to halve HBM traffic; no wrapper-side cast pass is added).
    All accumulation / bias / activation math is f32.
    """
    n, d = e_g.shape
    out_dtype = e_g.dtype
    act_dtype = e_g.dtype
    f32 = jnp.float32

    # ---- lane packing: p consecutive batch rows per 128-lane row ----------
    p = 128 // d if (d <= 128 and 128 % d == 0) else 1
    L = p * d

    # ---- weights (tiny, prepared once, VMEM-resident across grid steps) ---
    w1 = params["w1"]
    eye = jnp.eye(p, dtype=f32)

    def block_rep(w):  # (d, d) -> (L, L) block-diagonal with p copies
        return jnp.kron(eye, w.astype(f32)).astype(act_dtype)

    w1g, w1s, w1t = block_rep(w1[:d]), block_rep(w1[d:2 * d]), block_rep(w1[2 * d:])
    b1 = jnp.tile(params["b1"].astype(f32).reshape(1, d), (1, p))        # (1, L)
    w2 = jnp.kron(eye, params["w2"].astype(f32).reshape(d, 1))           # (L, p)
    b2 = params["b2"].astype(f32).reshape(1, 1)                          # (1, 1)

    # ---- pack the batch (free row-major reshape; pad only to a multiple of
    #      p, i.e. at most p-1 rows — no tile-sized padding pass) -----------
    n_pad = _round_up(n, p)
    if n_pad != n:
        pads = ((0, n_pad - n), (0, 0))
        e_g, e_s, h_t = (jnp.pad(x, pads) for x in (e_g, e_s, h_t))
    r_total = n_pad // p
    eg_p = e_g.reshape(r_total, L)
    es_p = e_s.reshape(r_total, L)
    ht_p = h_t.reshape(r_total, L)

    # ---- batch tile size: true lane-padded VMEM footprint, big tiles ------
    in_item = jnp.dtype(act_dtype).itemsize
    vmem_limit = _vmem_limit_bytes()
    lane_in = max(L, 128)                       # VMEM rounds the lane dim to 128
    per_row = (3 * 2 * lane_in * in_item        # 3 inputs, double-buffered
               + 2 * 128 * 4                    # output tile (lane-padded), 2 bufs
               + 4 * lane_in * 4)               # f32 hidden + epilogue temps
    budget = vmem_limit // 2                    # headroom for weights / scratch
    r_cap = max(8, budget // per_row)
    if rows_per_step is not None:
        r_cap = min(r_cap, max(1, int(rows_per_step) // p))
    r_tile = min(r_cap, r_total)
    if r_total >= 16:
        # keep >= 2 grid steps so both TensorCores of a 2-TC chip (v7x) get
        # work via the "parallel" batch axis
        r_tile = min(r_tile, _round_up(pl.cdiv(r_total, 2), 8))
    if r_tile < r_total:
        r_tile = max(8, (r_tile // 8) * 8)      # sublane-aligned partial blocks

    grid = (pl.cdiv(r_total, r_tile),)          # ragged last block handled by Pallas

    act_spec = pl.BlockSpec((r_tile, L), lambda i: (i, 0))
    res = lambda shape: pl.BlockSpec(shape, lambda i: (0, 0))  # resident weights

    out = pl.pallas_call(
        _mlp_kernel,
        out_shape=jax.ShapeDtypeStruct((r_total, p), out_dtype),
        grid=grid,
        in_specs=[act_spec, act_spec, act_spec,
                  res((L, L)), res((L, L)), res((L, L)),   # block-diag W1 pieces
                  res((1, L)),                             # b1 (tiled)
                  res((L, p)),                             # block-diag w2
                  res((1, 1))],                            # b2
        out_specs=pl.BlockSpec((r_tile, p), lambda i: (i, 0)),
        compiler_params=pltpu.CompilerParams(
            dimension_semantics=("parallel",),
            vmem_limit_bytes=int(vmem_limit),
        ),
    )(eg_p, es_p, ht_p, w1g, w1s, w1t, b1, w2, b2)

    # (r_total, p) -> (n_pad, 1) is a free row-major view; slice off pad rows.
    return out.reshape(n_pad, 1)[:n]


def init_params(key, embed_dim, dtype=jnp.float32):
    """Deterministic init mimicking nn.Linear's uniform(-1/sqrt(fan_in), ...)."""
    k1, k2, k3, k4 = jax.random.split(key, 4)
    bound1 = 1.0 / jnp.sqrt(3 * embed_dim)
    bound2 = 1.0 / jnp.sqrt(embed_dim)
    return {
        "w1": jax.random.uniform(k1, (3 * embed_dim, embed_dim), dtype,
                                 minval=-bound1, maxval=bound1),
        "b1": jax.random.uniform(k2, (embed_dim,), dtype,
                                 minval=-bound1, maxval=bound1),
        "w2": jax.random.uniform(k3, (embed_dim, 1), dtype,
                                 minval=-bound2, maxval=bound2),
        "b2": jax.random.uniform(k4, (1,), dtype,
                                 minval=-bound2, maxval=bound2),
    }


def mlp_ref(e_g, e_s, h_t, params):
    """Pure-JAX reference for correctness checking."""
    flat = jnp.concatenate([e_g, e_s, h_t], axis=-1)
    h = flat @ params["w1"] + params["b1"]
    h = jnp.where(h >= 0, h, 0.01 * h)
    return h @ params["w2"] + params["b2"]


if __name__ == "__main__":
    embed_dim = 32

    key = jax.random.PRNGKey(0)
    kp, kg, ks, kt = jax.random.split(key, 4)
    params = init_params(kp, embed_dim)

    # --- small case (matches the module's toy usage) ---
    batch = 8
    e_g = jax.random.normal(kg, (batch, embed_dim), jnp.float32)
    e_s = jax.random.normal(ks, (batch, embed_dim), jnp.float32)
    h_t = jax.random.normal(kt, (batch, embed_dim), jnp.float32)

    out = jax.block_until_ready(mlp_forward(e_g, e_s, h_t, params))
    ref = mlp_ref(e_g, e_s, h_t, params)
    assert out.shape == (batch, 1)
    assert jnp.allclose(out, ref, atol=2e-4, rtol=2e-4)

    # --- batch not divisible by the pack factor or tile: exercises the
    #     small remainder pad + ragged last grid block + multi-step grid ---
    batch2 = 517
    kg2, ks2, kt2 = jax.random.split(jax.random.PRNGKey(1), 3)
    e_g2 = jax.random.normal(kg2, (batch2, embed_dim), jnp.float32)
    e_s2 = jax.random.normal(ks2, (batch2, embed_dim), jnp.float32)
    h_t2 = jax.random.normal(kt2, (batch2, embed_dim), jnp.float32)

    out2 = jax.block_until_ready(mlp_forward(e_g2, e_s2, h_t2, params))
    ref2 = mlp_ref(e_g2, e_s2, h_t2, params)
    assert out2.shape == (batch2, 1)
    assert jnp.allclose(out2, ref2, atol=2e-4, rtol=2e-4)

    # --- bf16 activation stream: inputs already bf16, so no extra cast pass;
    #     accumulation / epilogue stay f32 inside the kernel ---
    out3 = jax.block_until_ready(
        mlp_forward(e_g2.astype(jnp.bfloat16), e_s2.astype(jnp.bfloat16),
                    h_t2.astype(jnp.bfloat16), params))
    assert out3.shape == (batch2, 1)
    assert jnp.allclose(out3.astype(jnp.float32), ref2, atol=7e-2, rtol=7e-2)

    print("KERNEL_OK")
</pallas_src>

<mosaic_0001>
module attributes {stable_mosaic.version = 11 : i64} {
  func.func @_mlp_kernel(%arg0: i32, %arg1: memref<2x128xf32, #tpu.memory_space<vmem>>, %arg2: memref<2x128xf32, #tpu.memory_space<vmem>>, %arg3: memref<2x128xf32, #tpu.memory_space<vmem>>, %arg4: memref<128x128xf32, #tpu.memory_space<vmem>>, %arg5: memref<128x128xf32, #tpu.memory_space<vmem>>, %arg6: memref<128x128xf32, #tpu.memory_space<vmem>>, %arg7: memref<1x128xf32, #tpu.memory_space<vmem>>, %arg8: memref<128x4xf32, #tpu.memory_space<vmem>>, %arg9: memref<1x1xf32, #tpu.memory_space<vmem>>, %arg10: memref<2x4xf32, #tpu.memory_space<vmem>>) attributes {dimension_semantics = [#tpu.dimension_semantics<parallel>], iteration_bounds = array<i64: 1>, scalar_prefetch = 0 : i64, scratch_operands = 0 : i64, tpu.core_type = #tpu.core_type<tc>, window_params = [{transform_indices = @transform_0, window_bounds = array<i64: 2, 128>}, {transform_indices = @transform_1, window_bounds = array<i64: 2, 128>}, {transform_indices = @transform_2, window_bounds = array<i64: 2, 128>}, {pipeline_mode = #tpu.pipeline_mode<synchronous>, transform_indices = @transform_3, window_bounds = array<i64: 128, 128>}, {pipeline_mode = #tpu.pipeline_mode<synchronous>, transform_indices = @transform_4, window_bounds = array<i64: 128, 128>}, {pipeline_mode = #tpu.pipeline_mode<synchronous>, transform_indices = @transform_5, window_bounds = array<i64: 128, 128>}, {pipeline_mode = #tpu.pipeline_mode<synchronous>, transform_indices = @transform_6, window_bounds = array<i64: 1, 128>}, {pipeline_mode = #tpu.pipeline_mode<synchronous>, transform_indices = @transform_7, window_bounds = array<i64: 128, 4>}, {pipeline_mode = #tpu.pipeline_mode<synchronous>, transform_indices = @transform_8, window_bounds = array<i64: 1, 1>}, {transform_indices = @transform_9, window_bounds = array<i64: 2, 4>}]} {
    %c0 = arith.constant 0 : index
    %c0_0 = arith.constant 0 : index
    %0 = vector.load %arg1[%c0, %c0_0] : memref<2x128xf32, #tpu.memory_space<vmem>>, vector<2x128xf32>
    %c0_1 = arith.constant 0 : index
    %c0_2 = arith.constant 0 : index
    %1 = vector.load %arg4[%c0_1, %c0_2] : memref<128x128xf32, #tpu.memory_space<vmem>>, vector<128x128xf32>
    %cst = arith.constant dense<0.000000e+00> : vector<2x128xf32>
    %2 = tpu.matmul %0, %1, %cst {dimension_numbers = #tpu.dot_dimension_numbers<[1], [0], [0], [1], [0, 0, 1, 1], [], []>} : vector<2x128xf32>, vector<128x128xf32>, vector<2x128xf32> -> vector<2x128xf32>
    %c0_3 = arith.constant 0 : index
    %c0_4 = arith.constant 0 : index
    %3 = vector.load %arg2[%c0_3, %c0_4] : memref<2x128xf32, #tpu.memory_space<vmem>>, vector<2x128xf32>
    %c0_5 = arith.constant 0 : index
    %c0_6 = arith.constant 0 : index
    %4 = vector.load %arg5[%c0_5, %c0_6] : memref<128x128xf32, #tpu.memory_space<vmem>>, vector<128x128xf32>
    %cst_7 = arith.constant dense<0.000000e+00> : vector<2x128xf32>
    %5 = tpu.matmul %3, %4, %cst_7 {dimension_numbers = #tpu.dot_dimension_numbers<[1], [0], [0], [1], [0, 0, 1, 1], [], []>} : vector<2x128xf32>, vector<128x128xf32>, vector<2x128xf32> -> vector<2x128xf32>
    %6 = arith.addf %2, %5 : vector<2x128xf32>
    %c0_8 = arith.constant 0 : index
    %c0_9 = arith.constant 0 : index
    %7 = vector.load %arg3[%c0_8, %c0_9] : memref<2x128xf32, #tpu.memory_space<vmem>>, vector<2x128xf32>
    %c0_10 = arith.constant 0 : index
    %c0_11 = arith.constant 0 : index
    %8 = vector.load %arg6[%c0_10, %c0_11] : memref<128x128xf32, #tpu.memory_space<vmem>>, vector<128x128xf32>
    %cst_12 = arith.constant dense<0.000000e+00> : vector<2x128xf32>
    %9 = tpu.matmul %7, %8, %cst_12 {dimension_numbers = #tpu.dot_dimension_numbers<[1], [0], [0], [1], [0, 0, 1, 1], [], []>} : vector<2x128xf32>, vector<128x128xf32>, vector<2x128xf32> -> vector<2x128xf32>
    %10 = arith.addf %6, %9 : vector<2x128xf32>
    %c0_13 = arith.constant 0 : index
    %c0_14 = arith.constant 0 : index
    %11 = vector.load %arg7[%c0_13, %c0_14] : memref<1x128xf32, #tpu.memory_space<vmem>>, vector<1x128xf32>
    %12 = vector.broadcast %11 : vector<1x128xf32> to vector<2x128xf32>
    %13 = arith.addf %10, %12 : vector<2x128xf32>
    %cst_15 = arith.constant 0.000000e+00 : f32
    %14 = vector.broadcast %cst_15 : f32 to vector<2x128xf32>
    %15 = arith.cmpf oge, %13, %14 : vector<2x128xf32>
    %cst_16 = arith.constant 0.00999999977 : f32
    %16 = vector.broadcast %cst_16 : f32 to vector<2x128xf32>
    %17 = arith.mulf %16, %13 : vector<2x128xf32>
    %18 = arith.select %15, %13, %17 : vector<2x128xi1>, vector<2x128xf32>
    %c0_17 = arith.constant 0 : index
    %c0_18 = arith.constant 0 : index
    %19 = vector.load %arg8[%c0_17, %c0_18] : memref<128x4xf32, #tpu.memory_space<vmem>>, vector<128x4xf32>
    %cst_19 = arith.constant dense<0.000000e+00> : vector<2x4xf32>
    %20 = tpu.matmul %18, %19, %cst_19 {dimension_numbers = #tpu.dot_dimension_numbers<[1], [0], [0], [1], [0, 0, 1, 1], [], []>} : vector<2x128xf32>, vector<128x4xf32>, vector<2x4xf32> -> vector<2x4xf32>
    %c0_20 = arith.constant 0 : index
    %c0_21 = arith.constant 0 : index
    %21 = vector.load %arg9[%c0_20, %c0_21] : memref<1x1xf32, #tpu.memory_space<vmem>>, vector<1x1xf32>
    %22 = vector.broadcast %21 : vector<1x1xf32> to vector<2x4xf32>
    %23 = arith.addf %20, %22 : vector<2x4xf32>
    %c0_22 = arith.constant 0 : index
    %c0_23 = arith.constant 0 : index
    %24 = vector.load %arg10[%c0_22, %c0_23] : memref<2x4xf32, #tpu.memory_space<vmem>>, vector<2x4xf32>
    tpu.vector_store %arg10[%c0_22, %c0_23], %23 {strides = array<i32>} : memref<2x4xf32, #tpu.memory_space<vmem>>, vector<2x4xf32>,
    return
  }
  func.func @transform_0(%arg0: i32) -> (i32, i32) {
    %c0_i32 = arith.constant 0 : i32
    %c0_i32_0 = arith.constant 0 : i32
    return %arg0, %c0_i32 : i32, i32
  }
  func.func @transform_1(%arg0: i32) -> (i32, i32) {
    %c0_i32 = arith.constant 0 : i32
    %c0_i32_0 = arith.constant 0 : i32
    return %arg0, %c0_i32 : i32, i32
  }
  func.func @transform_2(%arg0: i32) -> (i32, i32) {
    %c0_i32 = arith.constant 0 : i32
    %c0_i32_0 = arith.constant 0 : i32
    return %arg0, %c0_i32 : i32, i32
  }
  func.func @transform_3(%arg0: i32) -> (i32, i32) {
    %c0_i32 = arith.constant 0 : i32
    %c0_i32_0 = arith.constant 0 : i32
    %c0_i32_1 = arith.constant 0 : i32
    return %c0_i32, %c0_i32_0 : i32, i32
  }
  func.func @transform_4(%arg0: i32) -> (i32, i32) {
    %c0_i32 = arith.constant 0 : i32
    %c0_i32_0 = arith.constant 0 : i32
    %c0_i32_1 = arith.constant 0 : i32
    return %c0_i32, %c0_i32_0 : i32, i32
  }
  func.func @transform_5(%arg0: i32) -> (i32, i32) {
    %c0_i32 = arith.constant 0 : i32
    %c0_i32_0 = arith.constant 0 : i32
    %c0_i32_1 = arith.constant 0 : i32
    return %c0_i32, %c0_i32_0 : i32, i32
  }
  func.func @transform_6(%arg0: i32) -> (i32, i32) {
    %c0_i32 = arith.constant 0 : i32
    %c0_i32_0 = arith.constant 0 : i32
    %c0_i32_1 = arith.constant 0 : i32
    return %c0_i32, %c0_i32_0 : i32, i32
  }
  func.func @transform_7(%arg0: i32) -> (i32, i32) {
    %c0_i32 = arith.constant 0 : i32
    %c0_i32_0 = arith.constant 0 : i32
    %c0_i32_1 = arith.constant 0 : i32
    return %c0_i32, %c0_i32_0 : i32, i32
  }
  func.func @transform_8(%arg0: i32) -> (i32, i32) {
    %c0_i32 = arith.constant 0 : i32
    %c0_i32_0 = arith.constant 0 : i32
    %c0_i32_1 = arith.constant 0 : i32
    return %c0_i32, %c0_i32_0 : i32, i32
  }
  func.func @transform_9(%arg0: i32) -> (i32, i32) {
    %c0_i32 = arith.constant 0 : i32
    %c0_i32_0 = arith.constant 0 : i32
    return %arg0, %c0_i32 : i32, i32
  }
}

</mosaic_0001>

<llo_original>
// kernel: tpu_custom_call.1
$region0: #{tpu_custom_call.1}
  #allocation0 [shape = 'u32[]', space=smem, size = 0x4, offset = 0x4, fixed_abs, tag = 'smem constant byte address 0x4 - core index']
  #allocation1 [shape = 'u32[144,128]{1,0:T(1,128)}', space=vmem, size = 0x12000, scoped, tag = 'internal scratch']
  #allocation2 [shape = 'f32[1,1]{1,0:T(1,128)S(1)}', space=vmem, size = 0x200, scoped, tag = 'scoped memory for tpu_custom_call.1']
  %s0 = inlined_call_operand.vmem [shape: f32[2,128], index: 0, kind: input, shape index: {}]
  %s1 = inlined_call_operand.vmem [shape: f32[2,128], index: 1, kind: input, shape index: {}]
  %s2 = inlined_call_operand.vmem [shape: f32[2,128], index: 2, kind: input, shape index: {}]
  %s3 = inlined_call_operand.vmem [shape: f32[128,128], index: 3, kind: input, shape index: {}]
  %s4 = inlined_call_operand.hbm [shape: f32[128,128], index: 4, kind: input, shape index: {}]
  %s5 = inlined_call_operand.hbm [shape: f32[128,128], index: 5, kind: input, shape index: {}]
  %s6 = inlined_call_operand.vmem [shape: f32[1,128], index: 6, kind: input, shape index: {}]
  %s7 = inlined_call_operand.vmem [shape: f32[128,4], index: 7, kind: input, shape index: {}]
  %s8 = inlined_call_operand.<no memory space> [shape: f32[1,1], index: 8, kind: input, shape index: {}]
  %s9 = inlined_call_operand.hbm [shape: f32[2,4], index: 9, kind: output, shape index: {}]
  %s10 = sld [smem:[#allocation0]]
  $region54: #{tpu_custom_call.1} parent=0
    _
  %s12 = ssub.s32 1, %s10
  %s13 = scalar_select 0, %s12, %s10
  %v14 = vstv %s8
  %15 = vst [vmem:[#allocation2] sm:$0x1] %v14
  $region1: #{tpu_custom_call.1} parent=0
    #allocation3 [shape = 'u8[65536]{0}', space=vmem, size = 0x10000, scoped, tag = 'input window, operand 4, single buffered']
    #allocation4 [shape = 's32[1]{0}', space=sflag, size = 0x4, scoped, tag = 'scoped memory for tpu_custom_call.1']
    #allocation5 [shape = 's32[1]{0}', space=sflag, size = 0x4, scoped, tag = 'scoped memory for tpu_custom_call.1']
    #allocation6 [shape = 'u8[65536]{0}', space=vmem, size = 0x10000, scoped, tag = 'input window, operand 5, single buffered']
    #allocation7 [shape = 's32[1]{0}', space=sflag, size = 0x4, scoped, tag = 'scoped memory for tpu_custom_call.1']
    #allocation8 [shape = 'u8[1024]{0}', space=vmem, size = 0x400, scoped, tag = 'output window, operand 0, single buffered']
    %16 = vsyncpa [#allocation4], 0
    %17 = vsyncpa [#allocation7], 0
    %18 = vsyncpa [#allocation5], 0
    // Predicated region
    $region2: #{tpu_custom_call.1} parent=1 // pred_check
      _
    $region3: #{tpu_custom_call.1} parent=1 // pred_check_branch
      %20 = sbr.rel (0) target = $region5
    $region4: #{tpu_custom_call.1} parent=1 // pred_region
      _
    $region5: #{tpu_custom_call.1} parent=1 // pred_fallthru
      _
    // Predicated region
    $region6: #{tpu_custom_call.1} parent=1 // pred_check
      _
    $region7: #{tpu_custom_call.1} parent=1 // pred_check_branch
      %22 = sbr.rel (0) target = $region9
    $region8: #{tpu_custom_call.1} parent=1 // pred_region
      _
    $region9: #{tpu_custom_call.1} parent=1 // pred_fallthru
      _
    // Predicated region
    $region10: #{tpu_custom_call.1} parent=1 // pred_check
      _
    $region11: #{tpu_custom_call.1} parent=1 // pred_check_branch
      %24 = sbr.rel (0) target = $region13
    $region12: #{tpu_custom_call.1} parent=1 // pred_region
      _
    $region13: #{tpu_custom_call.1} parent=1 // pred_fallthru
      _
    // Predicated region
    $region14: #{tpu_custom_call.1} parent=1 // pred_check
      _
    $region15: #{tpu_custom_call.1} parent=1 // pred_check_branch
      %26 = sbr.rel (0) target = $region17
    $region16: #{tpu_custom_call.1} parent=1 // pred_region
      _
    $region17: #{tpu_custom_call.1} parent=1 // pred_fallthru
      _
    // Predicated region
    $region18: #{tpu_custom_call.1} parent=1 // pred_check
      _
    $region19: #{tpu_custom_call.1} parent=1 // pred_check_branch
      %28 = sbr.rel (0) target = $region21
    $region20: #{tpu_custom_call.1} parent=1 // pred_region
      %s30 = ssub.s32 2048, 2048
      %31 = vsyncadd [#allocation4], %s30
      %s32 = sshll.u32 [#allocation3], 4
      %s33 = int_to_ptr.vmem [resolvable:$true] %s32
      %38 = dma.hbm_to_vmem [thread:$0]  %s4, 2048, %s33, [#allocation4], 128, 128, 8
    $region21: #{tpu_custom_call.1} parent=1 // pred_fallthru
      _
    // Predicated region
    $region22: #{tpu_custom_call.1} parent=1 // pred_check
      _
    $region23: #{tpu_custom_call.1} parent=1 // pred_check_branch
      %40 = sbr.rel (0) target = $region25
    $region24: #{tpu_custom_call.1} parent=1 // pred_region
      %s42 = ssub.s32 2048, 2048
      %43 = vsyncadd [#allocation7], %s42
      %s44 = sshll.u32 [#allocation6], 4
      %s45 = int_to_ptr.vmem [resolvable:$true] %s44
      %50 = dma.hbm_to_vmem [thread:$0]  %s5, 2048, %s45, [#allocation7], 128, 128, 8
    $region25: #{tpu_custom_call.1} parent=1 // pred_fallthru
      _
    // Predicated region
    $region26: #{tpu_custom_call.1} parent=1 // pred_check
      _
    $region27: #{tpu_custom_call.1} parent=1 // pred_check_branch
      %52 = sbr.rel (0) target = $region29
    $region28: #{tpu_custom_call.1} parent=1 // pred_region
      _
    $region29: #{tpu_custom_call.1} parent=1 // pred_fallthru
      _
    // Predicated region
    $region30: #{tpu_custom_call.1} parent=1 // pred_check
      _
    $region31: #{tpu_custom_call.1} parent=1 // pred_check_branch
      %54 = sbr.rel (0) target = $region33
    $region32: #{tpu_custom_call.1} parent=1 // pred_region
      _
    $region33: #{tpu_custom_call.1} parent=1 // pred_fallthru
      _
    // Predicated region
    $region34: #{tpu_custom_call.1} parent=1 // pred_check
      _
    $region35: #{tpu_custom_call.1} parent=1 // pred_check_branch
      %56 = sbr.rel (0) target = $region37
    $region36: #{tpu_custom_call.1} parent=1 // pred_region
      _
    $region37: #{tpu_custom_call.1} parent=1 // pred_fallthru
      _
    // Predicated region
    $region38: #{tpu_custom_call.1} parent=1 // pred_check
      _
    $region39: #{tpu_custom_call.1} parent=1 // pred_check_branch
      %58 = sbr.rel (0) target = $region41
    $region40: #{tpu_custom_call.1} parent=1 // pred_region
      %59 = dma.done [#allocation4], 2048
    $region41: #{tpu_custom_call.1} parent=1 // pred_fallthru
      _
    // Predicated region
    $region42: #{tpu_custom_call.1} parent=1 // pred_check
      _
    $region43: #{tpu_custom_call.1} parent=1 // pred_check_branch
      %61 = sbr.rel (0) target = $region45
    $region44: #{tpu_custom_call.1} parent=1 // pred_region
      %62 = dma.done [#allocation7], 2048
    $region45: #{tpu_custom_call.1} parent=1 // pred_fallthru
      _
    %v63 = vld [vmem:[%s0] sm:$0x3]
    %v64 = vld [vmem:[%s3] sm:$0xff]
    %v65 = vld [vmem:[%s3 + $0x8] sm:$0xff]
    %v66 = vld [vmem:[%s3 + $0x10] sm:$0xff]
    %v67 = vld [vmem:[%s3 + $0x18] sm:$0xff]
    %v68 = vld [vmem:[%s3 + $0x20] sm:$0xff]
    %v69 = vld [vmem:[%s3 + $0x28] sm:$0xff]
    %v70 = vld [vmem:[%s3 + $0x30] sm:$0xff]
    %v71 = vld [vmem:[%s3 + $0x38] sm:$0xff]
    %v72 = vld [vmem:[%s3 + $0x40] sm:$0xff]
    %v73 = vld [vmem:[%s3 + $0x48] sm:$0xff]
    %v74 = vld [vmem:[%s3 + $0x50] sm:$0xff]
    %v75 = vld [vmem:[%s3 + $0x58] sm:$0xff]
    %v76 = vld [vmem:[%s3 + $0x60] sm:$0xff]
    %v77 = vld [vmem:[%s3 + $0x68] sm:$0xff]
    %v78 = vld [vmem:[%s3 + $0x70] sm:$0xff]
    %v79 = vld [vmem:[%s3 + $0x78] sm:$0xff]
    %v80 = vld [vmem:[%s1] sm:$0x3]
    %v81 = vld [vmem:[#allocation3] sm:$0xff]
    %v82 = vld [vmem:[#allocation3 + $0x8] sm:$0xff]
    %v83 = vld [vmem:[#allocation3 + $0x10] sm:$0xff]
    %v84 = vld [vmem:[#allocation3 + $0x18] sm:$0xff]
    %v85 = vld [vmem:[#allocation3 + $0x20] sm:$0xff]
    %v86 = vld [vmem:[#allocation3 + $0x28] sm:$0xff]
    %v87 = vld [vmem:[#allocation3 + $0x30] sm:$0xff]
    %v88 = vld [vmem:[#allocation3 + $0x38] sm:$0xff]
    %v89 = vld [vmem:[#allocation3 + $0x40] sm:$0xff]
    %v90 = vld [vmem:[#allocation3 + $0x48] sm:$0xff]
    %v91 = vld [vmem:[#allocation3 + $0x50] sm:$0xff]
    %v92 = vld [vmem:[#allocation3 + $0x58] sm:$0xff]
    %v93 = vld [vmem:[#allocation3 + $0x60] sm:$0xff]
    %v94 = vld [vmem:[#allocation3 + $0x68] sm:$0xff]
    %v95 = vld [vmem:[#allocation3 + $0x70] sm:$0xff]
    %v96 = vld [vmem:[#allocation3 + $0x78] sm:$0xff]
    %97 = vmatprep.subr.mxu0 0.0
    %98 = vmatpush1.msra.mxu0 %v81
    %99 = vmatprep.subr.mxu0 0.0
    %100 = vmatpush1.msra.mxu0 %v82
    %101 = vmatprep.subr.mxu0 0.0
    %102 = vmatpush1.msra.mxu0 %v83
    %103 = vmatprep.subr.mxu0 0.0
    %104 = vmatpush1.msra.mxu0 %v84
    %105 = vmatprep.subr.mxu0 0.0
    %106 = vmatpush1.msra.mxu0 %v85
    %107 = vmatprep.subr.mxu0 0.0
    %108 = vmatpush1.msra.mxu0 %v86
    %109 = vmatprep.subr.mxu0 0.0
    %110 = vmatpush1.msra.mxu0 %v87
    %111 = vmatprep.subr.mxu0 0.0
    %112 = vmatpush1.msra.mxu0 %v88
    %113 = vmatprep.subr.mxu0 0.0
    %114 = vmatpush1.msra.mxu0 %v89
    %115 = vmatprep.subr.mxu0 0.0
    %116 = vmatpush1.msra.mxu0 %v90
    %117 = vmatprep.subr.mxu0 0.0
    %118 = vmatpush1.msra.mxu0 %v91
    %119 = vmatprep.subr.mxu0 0.0
    %120 = vmatpush1.msra.mxu0 %v92
    %121 = vmatprep.subr.mxu0 0.0
    %122 = vmatpush1.msra.mxu0 %v93
    %123 = vmatprep.subr.mxu0 0.0
    %124 = vmatpush1.msra.mxu0 %v94
    %125 = vmatprep.subr.mxu0 0.0
    %126 = vmatpush1.msra.mxu0 %v95
    %127 = vmatprep.subr.mxu0 0.0
    %128 = vmatpush1.msra.mxu0 %v96
    %129 = vmatprep.subr.mxu0 0.0
    %130 = vmatpush1.msra.mxu0 0.0
    %131 = vmatprep.subr.mxu0 0.0
    %132 = vmatpush1.msra.mxu0 0.0
    %133 = vmatprep.subr.mxu0 0.0
    %134 = vmatpush1.msra.mxu0 0.0
    %135 = vmatprep.subr.mxu0 0.0
    %136 = vmatpush1.msra.mxu0 0.0
    %137 = vmatprep.subr.mxu0 0.0
    %138 = vmatpush1.msra.mxu0 0.0
    %139 = vmatprep.subr.mxu0 0.0
    %140 = vmatpush1.msra.mxu0 0.0
    %141 = vmatprep.subr.mxu0 0.0
    %142 = vmatpush1.msra.mxu0 0.0
    %143 = vmatprep.subr.mxu0 0.0
    %144 = vmatpush1.msra.mxu0 0.0
    %145 = vmatprep.subr.mxu0 0.0
    %146 = vmatpush1.msra.mxu0 0.0
    %147 = vmatprep.subr.mxu0 0.0
    %148 = vmatpush1.msra.mxu0 0.0
    %149 = vmatprep.subr.mxu0 0.0
    %150 = vmatpush1.msra.mxu0 0.0
    %151 = vmatprep.subr.mxu0 0.0
    %152 = vmatpush1.msra.mxu0 0.0
    %153 = vmatprep.subr.mxu0 0.0
    %154 = vmatpush1.msra.mxu0 0.0
    %155 = vmatprep.subr.mxu0 0.0
    %156 = vmatpush1.msra.mxu0 0.0
    %157 = vmatprep.subr.mxu0 0.0
    %158 = vmatpush1.msra.mxu0 0.0
    %159 = vmatprep.subr.mxu0 0.0
    %160 = vmatpush1.msra.mxu0 0.0
    %161 = vmatprep.mubr.f32.mxu0 0.0
    %162 = vmatmul.mubr.f32.gmra.mrb[0].mxu0 %v80
    %v163 = vpop.f32.mrb[0].mxu0
    %v164 = vadd.f32 0.0, %v163
    %v165 = vpop.f32.mrb[0].mxu0
    %166 = vdwg.mxu0
    %167 = vmatprep.subr.mxu0 0.0
    %168 = vmatpush1.msra.mxu0 %v64
    %169 = vmatprep.subr.mxu0 0.0
    %170 = vmatpush1.msra.mxu0 %v65
    %171 = vmatprep.subr.mxu0 0.0
    %172 = vmatpush1.msra.mxu0 %v66
    %173 = vmatprep.subr.mxu0 0.0
    %174 = vmatpush1.msra.mxu0 %v67
    %175 = vmatprep.subr.mxu0 0.0
    %176 = vmatpush1.msra.mxu0 %v68
    %177 = vmatprep.subr.mxu0 0.0
    %178 = vmatpush1.msra.mxu0 %v69
    %179 = vmatprep.subr.mxu0 0.0
    %180 = vmatpush1.msra.mxu0 %v70
    %181 = vmatprep.subr.mxu0 0.0
    %182 = vmatpush1.msra.mxu0 %v71
    %183 = vmatprep.subr.mxu0 0.0
    %184 = vmatpush1.msra.mxu0 %v72
    %185 = vmatprep.subr.mxu0 0.0
    %186 = vmatpush1.msra.mxu0 %v73
    %187 = vmatprep.subr.mxu0 0.0
    %188 = vmatpush1.msra.mxu0 %v74
    %189 = vmatprep.subr.mxu0 0.0
    %190 = vmatpush1.msra.mxu0 %v75
    %191 = vmatprep.subr.mxu0 0.0
    %192 = vmatpush1.msra.mxu0 %v76
    %193 = vmatprep.subr.mxu0 0.0
    %194 = vmatpush1.msra.mxu0 %v77
    %195 = vmatprep.subr.mxu0 0.0
    %196 = vmatpush1.msra.mxu0 %v78
    %197 = vmatprep.subr.mxu0 0.0
    %198 = vmatpush1.msra.mxu0 %v79
    %199 = vmatprep.subr.mxu0 0.0
    %200 = vmatpush1.msra.mxu0 0.0
    %201 = vmatprep.subr.mxu0 0.0
    %202 = vmatpush1.msra.mxu0 0.0
    %203 = vmatprep.subr.mxu0 0.0
    %204 = vmatpush1.msra.mxu0 0.0
    %205 = vmatprep.subr.mxu0 0.0
    %206 = vmatpush1.msra.mxu0 0.0
    %207 = vmatprep.subr.mxu0 0.0
    %208 = vmatpush1.msra.mxu0 0.0
    %209 = vmatprep.subr.mxu0 0.0
    %210 = vmatpush1.msra.mxu0 0.0
    %211 = vmatprep.subr.mxu0 0.0
    %212 = vmatpush1.msra.mxu0 0.0
    %213 = vmatprep.subr.mxu0 0.0
    %214 = vmatpush1.msra.mxu0 0.0
    %215 = vmatprep.subr.mxu0 0.0
    %216 = vmatpush1.msra.mxu0 0.0
    %217 = vmatprep.subr.mxu0 0.0
    %218 = vmatpush1.msra.mxu0 0.0
    %219 = vmatprep.subr.mxu0 0.0
    %220 = vmatpush1.msra.mxu0 0.0
    %221 = vmatprep.subr.mxu0 0.0
    %222 = vmatpush1.msra.mxu0 0.0
    %223 = vmatprep.subr.mxu0 0.0
    %224 = vmatpush1.msra.mxu0 0.0
    %225 = vmatprep.subr.mxu0 0.0
    %226 = vmatpush1.msra.mxu0 0.0
    %227 = vmatprep.subr.mxu0 0.0
    %228 = vmatpush1.msra.mxu0 0.0
    %229 = vmatprep.subr.mxu0 0.0
    %230 = vmatpush1.msra.mxu0 0.0
    %231 = vmatprep.mubr.f32.mxu0 0.0
    %232 = vmatmul.mubr.f32.gmra.mrb[0].mxu0 %v63
    %v233 = vpop.f32.mrb[0].mxu0
    %v234 = vadd.f32 %v164, %v233
    %v235 = vpop.f32.mrb[0].mxu0
    %236 = vdwg.mxu0
    %v237 = vld [vmem:[%s2] sm:$0x3]
    %v238 = vld [vmem:[#allocation6] sm:$0xff]
    %v239 = vld [vmem:[#allocation6 + $0x8] sm:$0xff]
    %v240 = vld [vmem:[#allocation6 + $0x10] sm:$0xff]
    %v241 = vld [vmem:[#allocation6 + $0x18] sm:$0xff]
    %v242 = vld [vmem:[#allocation6 + $0x20] sm:$0xff]
    %v243 = vld [vmem:[#allocation6 + $0x28] sm:$0xff]
    %v244 = vld [vmem:[#allocation6 + $0x30] sm:$0xff]
    %v245 = vld [vmem:[#allocation6 + $0x38] sm:$0xff]
    %v246 = vld [vmem:[#allocation6 + $0x40] sm:$0xff]
    %v247 = vld [vmem:[#allocation6 + $0x48] sm:$0xff]
    %v248 = vld [vmem:[#allocation6 + $0x50] sm:$0xff]
    %v249 = vld [vmem:[#allocation6 + $0x58] sm:$0xff]
    %v250 = vld [vmem:[#allocation6 + $0x60] sm:$0xff]
    %v251 = vld [vmem:[#allocation6 + $0x68] sm:$0xff]
    %v252 = vld [vmem:[#allocation6 + $0x70] sm:$0xff]
    %v253 = vld [vmem:[#allocation6 + $0x78] sm:$0xff]
    %254 = vmatprep.subr.mxu0 0.0
    %255 = vmatpush1.msra.mxu0 %v238
    %256 = vmatprep.subr.mxu0 0.0
    %257 = vmatpush1.msra.mxu0 %v239
    %258 = vmatprep.subr.mxu0 0.0
    %259 = vmatpush1.msra.mxu0 %v240
    %260 = vmatprep.subr.mxu0 0.0
    %261 = vmatpush1.msra.mxu0 %v241
    %262 = vmatprep.subr.mxu0 0.0
    %263 = vmatpush1.msra.mxu0 %v242
    %264 = vmatprep.subr.mxu0 0.0
    %265 = vmatpush1.msra.mxu0 %v243
    %266 = vmatprep.subr.mxu0 0.0
    %267 = vmatpush1.msra.mxu0 %v244
    %268 = vmatprep.subr.mxu0 0.0
    %269 = vmatpush1.msra.mxu0 %v245
    %270 = vmatprep.subr.mxu0 0.0
    %271 = vmatpush1.msra.mxu0 %v246
    %272 = vmatprep.subr.mxu0 0.0
    %273 = vmatpush1.msra.mxu0 %v247
    %274 = vmatprep.subr.mxu0 0.0
    %275 = vmatpush1.msra.mxu0 %v248
    %276 = vmatprep.subr.mxu0 0.0
    %277 = vmatpush1.msra.mxu0 %v249
    %278 = vmatprep.subr.mxu0 0.0
    %279 = vmatpush1.msra.mxu0 %v250
    %280 = vmatprep.subr.mxu0 0.0
    %281 = vmatpush1.msra.mxu0 %v251
    %282 = vmatprep.subr.mxu0 0.0
    %283 = vmatpush1.msra.mxu0 %v252
    %284 = vmatprep.subr.mxu0 0.0
    %285 = vmatpush1.msra.mxu0 %v253
    %286 = vmatprep.subr.mxu0 0.0
    %287 = vmatpush1.msra.mxu0 0.0
    %288 = vmatprep.subr.mxu0 0.0
    %289 = vmatpush1.msra.mxu0 0.0
    %290 = vmatprep.subr.mxu0 0.0
    %291 = vmatpush1.msra.mxu0 0.0
    %292 = vmatprep.subr.mxu0 0.0
    %293 = vmatpush1.msra.mxu0 0.0
    %294 = vmatprep.subr.mxu0 0.0
    %295 = vmatpush1.msra.mxu0 0.0
    %296 = vmatprep.subr.mxu0 0.0
    %297 = vmatpush1.msra.mxu0 0.0
    %298 = vmatprep.subr.mxu0 0.0
    %299 = vmatpush1.msra.mxu0 0.0
    %300 = vmatprep.subr.mxu0 0.0
    %301 = vmatpush1.msra.mxu0 0.0
    %302 = vmatprep.subr.mxu0 0.0
    %303 = vmatpush1.msra.mxu0 0.0
    %304 = vmatprep.subr.mxu0 0.0
    %305 = vmatpush1.msra.mxu0 0.0
    %306 = vmatprep.subr.mxu0 0.0
    %307 = vmatpush1.msra.mxu0 0.0
    %308 = vmatprep.subr.mxu0 0.0
    %309 = vmatpush1.msra.mxu0 0.0
    %310 = vmatprep.subr.mxu0 0.0
    %311 = vmatpush1.msra.mxu0 0.0
    %312 = vmatprep.subr.mxu0 0.0
    %313 = vmatpush1.msra.mxu0 0.0
    %314 = vmatprep.subr.mxu0 0.0
    %315 = vmatpush1.msra.mxu0 0.0
    %316 = vmatprep.subr.mxu0 0.0
    %317 = vmatpush1.msra.mxu0 0.0
    %318 = vmatprep.mubr.f32.mxu0 0.0
    %319 = vmatmul.mubr.f32.gmra.mrb[0].mxu0 %v237
    %v320 = vpop.f32.mrb[0].mxu0
    %v321 = vadd.f32 0.0, %v320
    %v322 = vpop.f32.mrb[0].mxu0
    %323 = vdwg.mxu0
    %v324 = vadd.f32 %v234, %v321
    %v325 = vld [vmem:[%s6] sm:$0x1]
    %v327 = vlaneseq
    %v328 = vshrl.u32 %v327, 7
    %v329 = vsub.s32 0, %v328
    %v330 = vrot.slane %v325, %v329
    %v332 = vadd.f32 %v324, %v330
    %vm333 = vcmp.ge.f32.partialorder %v332, 0.0
    %v334 = vmul.f32 %v332, 0.01
    %v335 = vsel %vm333, %v332, %v334
    %v336 = vld [vmem:[%s7] sm:$0xff]
    %v337 = vld [vmem:[%s7 + $0x8] sm:$0xff]
    %v338 = vld [vmem:[%s7 + $0x10] sm:$0xff]
    %v339 = vld [vmem:[%s7 + $0x18] sm:$0xff]
    %v340 = vld [vmem:[%s7 + $0x20] sm:$0xff]
    %v341 = vld [vmem:[%s7 + $0x28] sm:$0xff]
    %v342 = vld [vmem:[%s7 + $0x30] sm:$0xff]
    %v343 = vld [vmem:[%s7 + $0x38] sm:$0xff]
    %v344 = vld [vmem:[%s7 + $0x40] sm:$0xff]
    %v345 = vld [vmem:[%s7 + $0x48] sm:$0xff]
    %v346 = vld [vmem:[%s7 + $0x50] sm:$0xff]
    %v347 = vld [vmem:[%s7 + $0x58] sm:$0xff]
    %v348 = vld [vmem:[%s7 + $0x60] sm:$0xff]
    %v349 = vld [vmem:[%s7 + $0x68] sm:$0xff]
    %v350 = vld [vmem:[%s7 + $0x70] sm:$0xff]
    %v351 = vld [vmem:[%s7 + $0x78] sm:$0xff]
    %v352 = vld [vmem:[#allocation2] sm:$0x1]
    %v354 = vlaneseq
    %v355 = vshrl.u32 %v354, 7
    %v356 = vsub.s32 0, %v355
    %v357 = vrot.slane %v352, %v356
    %358 = vset.pattern.permute.xlu0 0
    %359 = vperm.xlu0 %358, %v357
    %v360 = vpop.permute.xlu0 %359
    %362 = vmatprep.subr.mxu0 0.0
    %363 = vmatpush1.msra.mxu0 %v336
    %364 = vmatprep.subr.mxu0 0.0
    %365 = vmatpush1.msra.mxu0 %v337
    %366 = vmatprep.subr.mxu0 0.0
    %367 = vmatpush1.msra.mxu0 %v338
    %368 = vmatprep.subr.mxu0 0.0
    %369 = vmatpush1.msra.mxu0 %v339
    %370 = vmatprep.subr.mxu0 0.0
    %371 = vmatpush1.msra.mxu0 %v340
    %372 = vmatprep.subr.mxu0 0.0
    %373 = vmatpush1.msra.mxu0 %v341
    %374 = vmatprep.subr.mxu0 0.0
    %375 = vmatpush1.msra.mxu0 %v342
    %376 = vmatprep.subr.mxu0 0.0
    %377 = vmatpush1.msra.mxu0 %v343
    %378 = vmatprep.subr.mxu0 0.0
    %379 = vmatpush1.msra.mxu0 %v344
    %380 = vmatprep.subr.mxu0 0.0
    %381 = vmatpush1.msra.mxu0 %v345
    %382 = vmatprep.subr.mxu0 0.0
    %383 = vmatpush1.msra.mxu0 %v346
    %384 = vmatprep.subr.mxu0 0.0
    %385 = vmatpush1.msra.mxu0 %v347
    %386 = vmatprep.subr.mxu0 0.0
    %387 = vmatpush1.msra.mxu0 %v348
    %388 = vmatprep.subr.mxu0 0.0
    %389 = vmatpush1.msra.mxu0 %v349
    %390 = vmatprep.subr.mxu0 0.0
    %391 = vmatpush1.msra.mxu0 %v350
    %392 = vmatprep.subr.mxu0 0.0
    %393 = vmatpush1.msra.mxu0 %v351
    %394 = vmatprep.subr.mxu0 0.0
    %395 = vmatpush1.msra.mxu0 0.0
    %396 = vmatprep.subr.mxu0 0.0
    %397 = vmatpush1.msra.mxu0 0.0
    %398 = vmatprep.subr.mxu0 0.0
    %399 = vmatpush1.msra.mxu0 0.0
    %400 = vmatprep.subr.mxu0 0.0
    %401 = vmatpush1.msra.mxu0 0.0
    %402 = vmatprep.subr.mxu0 0.0
    %403 = vmatpush1.msra.mxu0 0.0
    %404 = vmatprep.subr.mxu0 0.0
    %405 = vmatpush1.msra.mxu0 0.0
    %406 = vmatprep.subr.mxu0 0.0
    %407 = vmatpush1.msra.mxu0 0.0
    %408 = vmatprep.subr.mxu0 0.0
    %409 = vmatpush1.msra.mxu0 0.0
    %410 = vmatprep.subr.mxu0 0.0
    %411 = vmatpush1.msra.mxu0 0.0
    %412 = vmatprep.subr.mxu0 0.0
    %413 = vmatpush1.msra.mxu0 0.0
    %414 = vmatprep.subr.mxu0 0.0
    %415 = vmatpush1.msra.mxu0 0.0
    %416 = vmatprep.subr.mxu0 0.0
    %417 = vmatpush1.msra.mxu0 0.0
    %418 = vmatprep.subr.mxu0 0.0
    %419 = vmatpush1.msra.mxu0 0.0
    %420 = vmatprep.subr.mxu0 0.0
    %421 = vmatpush1.msra.mxu0 0.0
    %422 = vmatprep.subr.mxu0 0.0
    %423 = vmatpush1.msra.mxu0 0.0
    %424 = vmatprep.subr.mxu0 0.0
    %425 = vmatpush1.msra.mxu0 0.0
    %426 = vmatprep.mubr.f32.mxu0 0.0
    %427 = vmatmul.mubr.f32.gmra.mrb[0].mxu0 %v335
    %v428 = vpop.f32.mrb[0].mxu0
    %v429 = vadd.f32 %v360, %v428
    %v430 = vpop.f32.mrb[0].mxu0
    %431 = vdwg.mxu0
    %vm432 = vcmask 25600
    %433 = vst.msk [vmem:[#allocation8] sm:$0x3] %vm432, %v429
    // Predicated region
    $region46: #{tpu_custom_call.1} parent=1 // pred_check
      _
    $region47: #{tpu_custom_call.1} parent=1 // pred_check_branch
      %435 = sbr.rel (0) target = $region49
    $region48: #{tpu_custom_call.1} parent=1 // pred_region
      %s437 = ssub.s32 32, 32
      %438 = vsyncadd [#allocation5], %s437
      %s440 = sshll.u32 [#allocation8], 4
      %s441 = int_to_ptr.vmem [resolvable:$true] %s440
      %443 = dma.vmem_to_hbm [thread:$0]  %s441, 32, %s9, [#allocation5]
    $region49: #{tpu_custom_call.1} parent=1 // pred_fallthru
      _
    // Predicated region
    $region50: #{tpu_custom_call.1} parent=1 // pred_check
      _
    $region51: #{tpu_custom_call.1} parent=1 // pred_check_branch
      %445 = sbr.rel (0) target = $region53
    $region52: #{tpu_custom_call.1} parent=1 // pred_region
      %446 = dma.done [#allocation5], 32
    $region53: #{tpu_custom_call.1} parent=1 // pred_fallthru
      _
    %447 = vsyncpa [#allocation4], 1
    %448 = vsyncpa [#allocation7], 1
    %449 = vsyncpa [#allocation5], 1

</llo_original>
